<compile_context>
chip_gen: v6e
topology: v6e:2x2x1
jax: 0.10.0
libtpu: 0.0.40
codegen_flags: <defaults>
</compile_context>

<pallas_src>
import jax
import jax.numpy as jnp
from jax.experimental import pallas as pl
from jax.experimental.pallas import tpu as pltpu

HIDDEN = 30


def _round_up(n, m):
    return ((n + m - 1) // m) * m


def policy_kernel(x_ref, w1_ref, b1_ref, wh_ref, bh_ref, out_ref):
    # x tile arrives in its native [TB, S] layout (no wrapper transpose/pad).
    x = x_ref[...]
    # h^T = relu(W1 @ x^T + b1): contract W1's S axis (dim 1) against the x
    # tile's S axis (dim 1) -> [H, TB].  Batch lives on the lane axis, so
    # vregs are fully populated and the operand reorientation is handled on
    # the MXU/XLU side, hidden under the streaming x DMA.
    hT = jax.lax.dot_general(
        w1_ref[...], x,
        dimension_numbers=(((1,), (1,)), ((), ())),
        preferred_element_type=jnp.float32)
    hT = jnp.maximum(hT + b1_ref[...], 0.0)
    # Fused mean/var heads: [2, H] @ [H, TB] -> [2, TB], one MXU pass.
    z = jnp.dot(wh_ref[...], hT, preferred_element_type=jnp.float32) + bh_ref[...]
    # Lane-dense (2, TB) store: row 0 = mean, row 1 = var.
    out_ref[...] = jax.nn.sigmoid(z)


def policy_forward(x, w1, b1, wm, bm, wv, bv, *, block_b=32768, min_grid=2):
    """Forward pass of Policy.

    x: [B, S] float32.  Parameters use PyTorch nn.Linear layout:
      w1 [H, S], b1 [H], wm/wv [1, H], bm/bv [1].
    Returns (mean, var), each [B, 1] float32.
    """
    B, S = x.shape
    H = w1.shape[0]

    # Fuse the two width-1 heads into one [2, H] projection (wrapper-side).
    w_heads = jnp.concatenate([wm, wv], axis=0)              # [2, H]
    b_heads = jnp.concatenate([bm, bv], axis=0)[:, None]     # [2, 1]
    b1_col = b1[:, None]                                     # [H, 1]

    # Batch tile: as large as the cap allows (amortizes per-step overhead and
    # gets near HBM roofline), but aim for >= `min_grid` grid steps so the
    # "parallel" axis shards across v7x's two TensorCores when B is large.
    # At the 32K cap: 2 x 2 MiB double-buffered x tiles + ~4 MiB f32
    # intermediates + 0.5 MiB output buffers << 32 MiB scoped VMEM.
    B128 = _round_up(B, 128)
    TB = min(block_b, max(128, _round_up(pl.cdiv(B128, min_grid), 128)))
    grid = (pl.cdiv(B, TB),)

    out = pl.pallas_call(
        policy_kernel,
        out_shape=jax.ShapeDtypeStruct((2, B), jnp.float32),
        grid=grid,
        in_specs=[
            # x in native [B, S]; the partial last tile is handled by Pallas
            # masking (garbage stays confined to discarded batch rows).
            pl.BlockSpec((TB, S), lambda i: (i, 0)),
            pl.BlockSpec((H, S), lambda i: (0, 0)),    # W1 resident across tiles
            pl.BlockSpec((H, 1), lambda i: (0, 0)),    # b1 resident
            pl.BlockSpec((2, H), lambda i: (0, 0)),    # fused head weights
            pl.BlockSpec((2, 1), lambda i: (0, 0)),    # fused head biases
        ],
        out_specs=pl.BlockSpec((2, TB), lambda i: (0, i)),
        compiler_params=pltpu.CompilerParams(
            dimension_semantics=("parallel",),          # megacore sharding (v7x)
            vmem_limit_bytes=32 * 1024 * 1024,          # headroom on v5e's 16 MiB default
        ),
    )(x, w1, b1_col, w_heads, b_heads)

    mean = out[0, :][:, None]
    var = out[1, :][:, None]
    return mean, var


def make_params(key, state_space, hidden=HIDDEN):
    # PyTorch init_weights(): uniform_(weight) -> U[0, 1); zeros_(bias).
    k1, k2, k3 = jax.random.split(key, 3)
    w1 = jax.random.uniform(k1, (hidden, state_space), dtype=jnp.float32)
    b1 = jnp.zeros((hidden,), jnp.float32)
    wm = jax.random.uniform(k2, (1, hidden), dtype=jnp.float32)
    bm = jnp.zeros((1,), jnp.float32)
    wv = jax.random.uniform(k3, (1, hidden), dtype=jnp.float32)
    bv = jnp.zeros((1,), jnp.float32)
    return w1, b1, wm, bm, wv, bv


if __name__ == "__main__":
    key = jax.random.PRNGKey(0)
    kx, kp = jax.random.split(key)

    batch, state_space = 8, 16
    x = jax.random.normal(kx, (batch, state_space), dtype=jnp.float32)
    params = make_params(kp, state_space)
    w1, b1, wm, bm, wv, bv = params

    mean, var = policy_forward(x, *params)
    jax.block_until_ready((mean, var))

    # Pure-JAX reference (same math as the PyTorch forward).
    hp = jax.lax.Precision.HIGHEST
    h_ref = jnp.maximum(jnp.dot(x, w1.T, precision=hp) + b1, 0.0)
    mean_ref = jax.nn.sigmoid(jnp.dot(h_ref, wm.T, precision=hp) + bm)
    var_ref = jax.nn.sigmoid(jnp.dot(h_ref, wv.T, precision=hp) + bv)
    assert mean.shape == (batch, 1) and var.shape == (batch, 1)
    assert jnp.allclose(mean, mean_ref, atol=1e-5)
    assert jnp.allclose(var, var_ref, atol=1e-5)

    # Larger batch exercises a multi-tile grid (3 tiles of 128) with a
    # partial (masked) last tile and resident-weight reuse across tiles.
    B2 = 300
    x2 = jax.random.normal(kx, (B2, state_space), dtype=jnp.float32)
    m2, v2 = policy_forward(x2, *params, block_b=128)
    jax.block_until_ready((m2, v2))
    h2 = jnp.maximum(jnp.dot(x2, w1.T, precision=hp) + b1, 0.0)
    m2_ref = jax.nn.sigmoid(jnp.dot(h2, wm.T, precision=hp) + bm)
    v2_ref = jax.nn.sigmoid(jnp.dot(h2, wv.T, precision=hp) + bv)
    assert m2.shape == (B2, 1) and v2.shape == (B2, 1)
    assert jnp.allclose(m2, m2_ref, atol=1e-5)
    assert jnp.allclose(v2, v2_ref, atol=1e-5)

    print("KERNEL_OK")
</pallas_src>

<mosaic_0001>
module attributes {stable_mosaic.version = 11 : i64} {
  func.func @policy_kernel(%arg0: i32, %arg1: memref<128x16xf32, #tpu.memory_space<vmem>>, %arg2: memref<30x16xf32, #tpu.memory_space<vmem>>, %arg3: memref<30x1xf32, #tpu.memory_space<vmem>>, %arg4: memref<2x30xf32, #tpu.memory_space<vmem>>, %arg5: memref<2x1xf32, #tpu.memory_space<vmem>>, %arg6: memref<2x128xf32, #tpu.memory_space<vmem>>) attributes {dimension_semantics = [#tpu.dimension_semantics<parallel>], iteration_bounds = array<i64: 1>, scalar_prefetch = 0 : i64, scratch_operands = 0 : i64, tpu.core_type = #tpu.core_type<tc>, window_params = [{transform_indices = @transform_0, window_bounds = array<i64: 128, 16>}, {pipeline_mode = #tpu.pipeline_mode<synchronous>, transform_indices = @transform_1, window_bounds = array<i64: 30, 16>}, {pipeline_mode = #tpu.pipeline_mode<synchronous>, transform_indices = @transform_2, window_bounds = array<i64: 30, 1>}, {pipeline_mode = #tpu.pipeline_mode<synchronous>, transform_indices = @transform_3, window_bounds = array<i64: 2, 30>}, {pipeline_mode = #tpu.pipeline_mode<synchronous>, transform_indices = @transform_4, window_bounds = array<i64: 2, 1>}, {transform_indices = @transform_5, window_bounds = array<i64: 2, 128>}]} {
    %c0 = arith.constant 0 : index
    %c0_0 = arith.constant 0 : index
    %0 = vector.load %arg1[%c0, %c0_0] : memref<128x16xf32, #tpu.memory_space<vmem>>, vector<128x16xf32>
    %c0_1 = arith.constant 0 : index
    %c0_2 = arith.constant 0 : index
    %1 = vector.load %arg2[%c0_1, %c0_2] : memref<30x16xf32, #tpu.memory_space<vmem>>, vector<30x16xf32>
    %cst = arith.constant dense<0.000000e+00> : vector<30x128xf32>
    %2 = tpu.matmul %1, %0, %cst {dimension_numbers = #tpu.dot_dimension_numbers<[1], [1], [0], [0], [0, 0, 1, 0], [], []>} : vector<30x16xf32>, vector<128x16xf32>, vector<30x128xf32> -> vector<30x128xf32>
    %c0_3 = arith.constant 0 : index
    %c0_4 = arith.constant 0 : index
    %3 = vector.load %arg3[%c0_3, %c0_4] : memref<30x1xf32, #tpu.memory_space<vmem>>, vector<30x1xf32>
    %4 = vector.broadcast %3 : vector<30x1xf32> to vector<30x128xf32>
    %5 = arith.addf %2, %4 : vector<30x128xf32>
    %cst_5 = arith.constant 0.000000e+00 : f32
    %6 = vector.broadcast %cst_5 : f32 to vector<30x128xf32>
    %7 = arith.maximumf %5, %6 : vector<30x128xf32>
    %c0_6 = arith.constant 0 : index
    %c0_7 = arith.constant 0 : index
    %8 = vector.load %arg4[%c0_6, %c0_7] : memref<2x30xf32, #tpu.memory_space<vmem>>, vector<2x30xf32>
    %cst_8 = arith.constant dense<0.000000e+00> : vector<2x128xf32>
    %9 = tpu.matmul %8, %7, %cst_8 {dimension_numbers = #tpu.dot_dimension_numbers<[1], [0], [0], [1], [0, 0, 1, 1], [], []>} : vector<2x30xf32>, vector<30x128xf32>, vector<2x128xf32> -> vector<2x128xf32>
    %c0_9 = arith.constant 0 : index
    %c0_10 = arith.constant 0 : index
    %10 = vector.load %arg5[%c0_9, %c0_10] : memref<2x1xf32, #tpu.memory_space<vmem>>, vector<2x1xf32>
    %11 = vector.broadcast %10 : vector<2x1xf32> to vector<2x128xf32>
    %12 = arith.addf %9, %11 : vector<2x128xf32>
    %13 = arith.negf %12 : vector<2x128xf32>
    %14 = math.exp %13 : vector<2x128xf32>
    %cst_11 = arith.constant 1.000000e+00 : f32
    %15 = vector.broadcast %cst_11 : f32 to vector<2x128xf32>
    %16 = arith.addf %15, %14 : vector<2x128xf32>
    %17 = arith.divf %15, %16 : vector<2x128xf32>
    %c0_12 = arith.constant 0 : index
    %c0_13 = arith.constant 0 : index
    %18 = vector.load %arg6[%c0_12, %c0_13] : memref<2x128xf32, #tpu.memory_space<vmem>>, vector<2x128xf32>
    tpu.vector_store %arg6[%c0_12, %c0_13], %17 {strides = array<i32>} : memref<2x128xf32, #tpu.memory_space<vmem>>, vector<2x128xf32>,
    return
  }
  func.func @transform_0(%arg0: i32) -> (i32, i32) {
    %c0_i32 = arith.constant 0 : i32
    %c0_i32_0 = arith.constant 0 : i32
    return %arg0, %c0_i32 : i32, i32
  }
  func.func @transform_1(%arg0: i32) -> (i32, i32) {
    %c0_i32 = arith.constant 0 : i32
    %c0_i32_0 = arith.constant 0 : i32
    %c0_i32_1 = arith.constant 0 : i32
    return %c0_i32, %c0_i32_0 : i32, i32
  }
  func.func @transform_2(%arg0: i32) -> (i32, i32) {
    %c0_i32 = arith.constant 0 : i32
    %c0_i32_0 = arith.constant 0 : i32
    %c0_i32_1 = arith.constant 0 : i32
    return %c0_i32, %c0_i32_0 : i32, i32
  }
  func.func @transform_3(%arg0: i32) -> (i32, i32) {
    %c0_i32 = arith.constant 0 : i32
    %c0_i32_0 = arith.constant 0 : i32
    %c0_i32_1 = arith.constant 0 : i32
    return %c0_i32, %c0_i32_0 : i32, i32
  }
  func.func @transform_4(%arg0: i32) -> (i32, i32) {
    %c0_i32 = arith.constant 0 : i32
    %c0_i32_0 = arith.constant 0 : i32
    %c0_i32_1 = arith.constant 0 : i32
    return %c0_i32, %c0_i32_0 : i32, i32
  }
  func.func @transform_5(%arg0: i32) -> (i32, i32) {
    %c0_i32 = arith.constant 0 : i32
    %c0_i32_0 = arith.constant 0 : i32
    return %c0_i32, %arg0 : i32, i32
  }
}

</mosaic_0001>

<llo_original>
// kernel: tpu_custom_call.1
$region0: #{tpu_custom_call.1}
  #allocation0 [shape = 'u32[]', space=smem, size = 0x4, offset = 0x4, fixed_abs, tag = 'smem constant byte address 0x4 - core index']
  #allocation1 [shape = 'u32[144,128]{1,0:T(1,128)}', space=vmem, size = 0x12000, scoped, tag = 'internal scratch']
  %s0 = inlined_call_operand.vmem [shape: f32[8,16], index: 0, kind: input, shape index: {}]
  %s1 = inlined_call_operand.vmem [shape: f32[30,16], index: 1, kind: input, shape index: {}]
  %s2 = inlined_call_operand.vmem [shape: f32[30,1], index: 2, kind: input, shape index: {}]
  %s3 = inlined_call_operand.vmem [shape: f32[2,30], index: 3, kind: input, shape index: {}]
  %s4 = inlined_call_operand.vmem [shape: f32[2,1], index: 4, kind: input, shape index: {}]
  %s5 = inlined_call_operand.hbm [shape: f32[2,8], index: 5, kind: output, shape index: {}]
  %s6 = sld [smem:[#allocation0]]
  $region30: #{tpu_custom_call.1} parent=0
    _
  %s8 = ssub.s32 1, %s6
  %s9 = scalar_select 0, %s8, %s6
  $region1: #{tpu_custom_call.1} parent=0
    #allocation2 [shape = 'u8[1024]{0}', space=vmem, size = 0x400, scoped, tag = 'output window, operand 0, single buffered']
    #allocation3 [shape = 's32[1]{0}', space=sflag, size = 0x4, scoped, tag = 'scoped memory for tpu_custom_call.1']
    %10 = vsyncpa [#allocation3], 0
    // Predicated region
    $region2: #{tpu_custom_call.1} parent=1 // pred_check
      _
    $region3: #{tpu_custom_call.1} parent=1 // pred_check_branch
      %12 = sbr.rel (0) target = $region5
    $region4: #{tpu_custom_call.1} parent=1 // pred_region
      _
    $region5: #{tpu_custom_call.1} parent=1 // pred_fallthru
      _
    // Predicated region
    $region6: #{tpu_custom_call.1} parent=1 // pred_check
      _
    $region7: #{tpu_custom_call.1} parent=1 // pred_check_branch
      %14 = sbr.rel (0) target = $region9
    $region8: #{tpu_custom_call.1} parent=1 // pred_region
      _
    $region9: #{tpu_custom_call.1} parent=1 // pred_fallthru
      _
    // Predicated region
    $region10: #{tpu_custom_call.1} parent=1 // pred_check
      _
    $region11: #{tpu_custom_call.1} parent=1 // pred_check_branch
      %16 = sbr.rel (0) target = $region13
    $region12: #{tpu_custom_call.1} parent=1 // pred_region
      _
    $region13: #{tpu_custom_call.1} parent=1 // pred_fallthru
      _
    // Predicated region
    $region14: #{tpu_custom_call.1} parent=1 // pred_check
      _
    $region15: #{tpu_custom_call.1} parent=1 // pred_check_branch
      %18 = sbr.rel (0) target = $region17
    $region16: #{tpu_custom_call.1} parent=1 // pred_region
      _
    $region17: #{tpu_custom_call.1} parent=1 // pred_fallthru
      _
    // Predicated region
    $region18: #{tpu_custom_call.1} parent=1 // pred_check
      _
    $region19: #{tpu_custom_call.1} parent=1 // pred_check_branch
      %20 = sbr.rel (0) target = $region21
    $region20: #{tpu_custom_call.1} parent=1 // pred_region
      _
    $region21: #{tpu_custom_call.1} parent=1 // pred_fallthru
      _
    %v21 = vld [vmem:[%s0] sm:$0xff]
    %v22 = vld [vmem:[%s0 + $0x8] sm:$0xff]
    %v23 = vld [vmem:[%s0 + $0x10] sm:$0xff]
    %v24 = vld [vmem:[%s0 + $0x18] sm:$0xff]
    %v25 = vld [vmem:[%s0 + $0x20] sm:$0xff]
    %v26 = vld [vmem:[%s0 + $0x28] sm:$0xff]
    %v27 = vld [vmem:[%s0 + $0x30] sm:$0xff]
    %v28 = vld [vmem:[%s0 + $0x38] sm:$0xff]
    %v29 = vld [vmem:[%s0 + $0x40] sm:$0xff]
    %v30 = vld [vmem:[%s0 + $0x48] sm:$0xff]
    %v31 = vld [vmem:[%s0 + $0x50] sm:$0xff]
    %v32 = vld [vmem:[%s0 + $0x58] sm:$0xff]
    %v33 = vld [vmem:[%s0 + $0x60] sm:$0xff]
    %v34 = vld [vmem:[%s0 + $0x68] sm:$0xff]
    %v35 = vld [vmem:[%s0 + $0x70] sm:$0xff]
    %v36 = vld [vmem:[%s0 + $0x78] sm:$0xff]
    %v37 = vld [vmem:[%s1] sm:$0xff]
    %v38 = vld [vmem:[%s1 + $0x8] sm:$0xff]
    %v39 = vld [vmem:[%s1 + $0x10] sm:$0xff]
    %v40 = vld [vmem:[%s1 + $0x18] sm:$0x3f]
    %v41 = vld [vmem:[%s2] sm:$0xff]
    %v42 = vld [vmem:[%s2 + $0x8] sm:$0xff]
    %v43 = vld [vmem:[%s2 + $0x10] sm:$0xff]
    %v44 = vld [vmem:[%s2 + $0x18] sm:$0x3f]
    %46 = vset.pattern.permute.xlu0 0
    %47 = vperm.xlu0 %46, %v41
    %v48 = vpop.permute.xlu0 %47
    %51 = vset.pattern.permute.xlu0 0
    %52 = vperm.xlu0 %51, %v42
    %v53 = vpop.permute.xlu0 %52
    %56 = vset.pattern.permute.xlu0 0
    %57 = vperm.xlu0 %56, %v43
    %v58 = vpop.permute.xlu0 %57
    %61 = vset.pattern.permute.xlu0 0
    %62 = vperm.xlu0 %61, %v44
    %v63 = vpop.permute.xlu0 %62
    %vm65 = vcmask 130048
    %v67 = vsel %vm65, %v37, 0
    %v70 = vsel %vm65, %v38, 0
    %v73 = vsel %vm65, %v39, 0
    %v76 = vsel %vm65, %v40, 0
    %v79 = vsel %vm65, %v21, 0
    %v82 = vsel %vm65, %v22, 0
    %v85 = vsel %vm65, %v23, 0
    %v88 = vsel %vm65, %v24, 0
    %v91 = vsel %vm65, %v25, 0
    %v94 = vsel %vm65, %v26, 0
    %v97 = vsel %vm65, %v27, 0
    %v100 = vsel %vm65, %v28, 0
    %v103 = vsel %vm65, %v29, 0
    %v106 = vsel %vm65, %v30, 0
    %v109 = vsel %vm65, %v31, 0
    %v112 = vsel %vm65, %v32, 0
    %v115 = vsel %vm65, %v33, 0
    %v118 = vsel %vm65, %v34, 0
    %v121 = vsel %vm65, %v35, 0
    %v124 = vsel %vm65, %v36, 0
    %126 = vmatprep.subr.mxu0 0.0
    %127 = vmatpush1.xpose.msra.mxu0 %v124
    %128 = vmatprep.subr.mxu0 0.0
    %129 = vmatpush1.xpose.msra.mxu0 %v121
    %130 = vmatprep.subr.mxu0 0.0
    %131 = vmatpush1.xpose.msra.mxu0 %v118
    %132 = vmatprep.subr.mxu0 0.0
    %133 = vmatpush1.xpose.msra.mxu0 %v115
    %134 = vmatprep.subr.mxu0 0.0
    %135 = vmatpush1.xpose.msra.mxu0 %v112
    %136 = vmatprep.subr.mxu0 0.0
    %137 = vmatpush1.xpose.msra.mxu0 %v109
    %138 = vmatprep.subr.mxu0 0.0
    %139 = vmatpush1.xpose.msra.mxu0 %v106
    %140 = vmatprep.subr.mxu0 0.0
    %141 = vmatpush1.xpose.msra.mxu0 %v103
    %142 = vmatprep.subr.mxu0 0.0
    %143 = vmatpush1.xpose.msra.mxu0 %v100
    %144 = vmatprep.subr.mxu0 0.0
    %145 = vmatpush1.xpose.msra.mxu0 %v97
    %146 = vmatprep.subr.mxu0 0.0
    %147 = vmatpush1.xpose.msra.mxu0 %v94
    %148 = vmatprep.subr.mxu0 0.0
    %149 = vmatpush1.xpose.msra.mxu0 %v91
    %150 = vmatprep.subr.mxu0 0.0
    %151 = vmatpush1.xpose.msra.mxu0 %v88
    %152 = vmatprep.subr.mxu0 0.0
    %153 = vmatpush1.xpose.msra.mxu0 %v85
    %154 = vmatprep.subr.mxu0 0.0
    %155 = vmatpush1.xpose.msra.mxu0 %v82
    %156 = vmatprep.subr.mxu0 0.0
    %157 = vmatpush1.xpose.msra.mxu0 %v79
    %158 = vmatprep.subr.mxu0 0.0
    %159 = vmatpush2.xpose.msra.mxu0 0.0
    %160 = vmatprep.subr.mxu0 0.0
    %161 = vmatpush2.xpose.msra.mxu0 0.0
    %162 = vmatprep.subr.mxu0 0.0
    %163 = vmatpush2.xpose.msra.mxu0 0.0
    %164 = vmatprep.subr.mxu0 0.0
    %165 = vmatpush2.xpose.msra.mxu0 0.0
    %166 = vmatprep.subr.mxu0 0.0
    %167 = vmatpush2.xpose.msra.mxu0 0.0
    %168 = vmatprep.subr.mxu0 0.0
    %169 = vmatpush2.xpose.msra.mxu0 0.0
    %170 = vmatprep.subr.mxu0 0.0
    %171 = vmatpush2.xpose.msra.mxu0 0.0
    %172 = vmatprep.subr.mxu0 0.0
    %173 = vmatpush2.xpose.msra.mxu0 0.0
    %174 = vmatprep.subr.mxu0 0.0
    %175 = vmatpush2.xpose.msra.mxu0 0.0
    %176 = vmatprep.subr.mxu0 0.0
    %177 = vmatpush2.xpose.msra.mxu0 0.0
    %178 = vmatprep.subr.mxu0 0.0
    %179 = vmatpush2.xpose.msra.mxu0 0.0
    %180 = vmatprep.subr.mxu0 0.0
    %181 = vmatpush2.xpose.msra.mxu0 0.0
    %182 = vmatprep.subr.mxu0 0.0
    %183 = vmatpush2.xpose.msra.mxu0 0.0
    %184 = vmatprep.subr.mxu0 0.0
    %185 = vmatpush2.xpose.msra.mxu0 0.0
    %186 = vmatprep.subr.mxu0 0.0
    %187 = vmatpush2.xpose.msra.mxu0 0.0
    %188 = vmatprep.subr.mxu0 0.0
    %189 = vmatpush2.xpose.msra.mxu0 0.0
    %190 = vmatprep.mubr.f32.mxu0 0.0
    %191 = vmatmul.mubr.f32.gmra.mxu0 %v67
    %v192 = vpop.f32.mrf.mxu0
    %v193 = vadd.f32 %v48, %v192
    %v194 = vpop.f32.mrf.mxu0
    %195 = vmatprep.mubr.f32.mxu0 0.0
    %196 = vmatmul.mubr.f32.gmra.mxu0 %v70
    %v197 = vpop.f32.mrf.mxu0
    %v198 = vadd.f32 %v53, %v197
    %v199 = vpop.f32.mrf.mxu0
    %200 = vmatprep.mubr.f32.mxu0 0.0
    %201 = vmatmul.mubr.f32.gmra.mxu0 %v73
    %v202 = vpop.f32.mrf.mxu0
    %v203 = vadd.f32 %v58, %v202
    %v204 = vpop.f32.mrf.mxu0
    %205 = vmatprep.mubr.f32.mxu0 0.0
    %206 = vmatmul.mubr.f32.gmra.mxu0 %v76
    %v207 = vpop.f32.mrf.mxu0
    %v208 = vadd.f32 %v63, %v207
    %v209 = vpop.f32.mrf.mxu0
    %210 = vdwg.mxu0
    %v211 = vmax.f32 %v193, 0.0
    %v212 = vmax.f32 %v198, 0.0
    %v213 = vmax.f32 %v203, 0.0
    %v214 = vmax.f32 %v208, 0.0
    %v215 = vld [vmem:[%s3] sm:$0x3]
    %v216 = vld [vmem:[%s4] sm:$0x3]
    %218 = vset.pattern.permute.xlu0 0
    %219 = vperm.xlu0 %218, %v216
    %v220 = vpop.permute.xlu0 %219
    %vm222 = vcmask 244736
    %v224 = vsel %vm222, %v215, 0
    %vm226 = vcmask 1045504
    %v228 = vsel %vm226, %v214, 0
    %230 = vmatprep.subr.mxu0 0.0
    %231 = vmatpush1.msra.mxu0 0.0
    %232 = vmatprep.subr.mxu0 0.0
    %233 = vmatpush1.msra.mxu0 0.0
    %234 = vmatprep.subr.mxu0 0.0
    %235 = vmatpush1.msra.mxu0 0.0
    %236 = vmatprep.subr.mxu0 0.0
    %237 = vmatpush1.msra.mxu0 0.0
    %238 = vmatprep.subr.mxu0 0.0
    %239 = vmatpush1.msra.mxu0 0.0
    %240 = vmatprep.subr.mxu0 0.0
    %241 = vmatpush1.msra.mxu0 0.0
    %242 = vmatprep.subr.mxu0 0.0
    %243 = vmatpush1.msra.mxu0 0.0
    %244 = vmatprep.subr.mxu0 0.0
    %245 = vmatpush1.msra.mxu0 0.0
    %246 = vmatprep.subr.mxu0 0.0
    %247 = vmatpush1.msra.mxu0 0.0
    %248 = vmatprep.subr.mxu0 0.0
    %249 = vmatpush1.msra.mxu0 0.0
    %250 = vmatprep.subr.mxu0 0.0
    %251 = vmatpush1.msra.mxu0 0.0
    %252 = vmatprep.subr.mxu0 0.0
    %253 = vmatpush1.msra.mxu0 0.0
    %254 = vmatprep.subr.mxu0 0.0
    %255 = vmatpush1.msra.mxu0 %v228
    %256 = vmatprep.subr.mxu0 0.0
    %257 = vmatpush1.msra.mxu0 %v213
    %258 = vmatprep.subr.mxu0 0.0
    %259 = vmatpush1.msra.mxu0 %v212
    %260 = vmatprep.subr.mxu0 0.0
    %261 = vmatpush1.msra.mxu0 %v211
    %262 = vmatprep.subr.mxu0 0.0
    %263 = vmatpush2.msra.mxu0 0.0
    %264 = vmatprep.subr.mxu0 0.0
    %265 = vmatpush2.msra.mxu0 0.0
    %266 = vmatprep.subr.mxu0 0.0
    %267 = vmatpush2.msra.mxu0 0.0
    %268 = vmatprep.subr.mxu0 0.0
    %269 = vmatpush2.msra.mxu0 0.0
    %270 = vmatprep.subr.mxu0 0.0
    %271 = vmatpush2.msra.mxu0 0.0
    %272 = vmatprep.subr.mxu0 0.0
    %273 = vmatpush2.msra.mxu0 0.0
    %274 = vmatprep.subr.mxu0 0.0
    %275 = vmatpush2.msra.mxu0 0.0
    %276 = vmatprep.subr.mxu0 0.0
    %277 = vmatpush2.msra.mxu0 0.0
    %278 = vmatprep.subr.mxu0 0.0
    %279 = vmatpush2.msra.mxu0 0.0
    %280 = vmatprep.subr.mxu0 0.0
    %281 = vmatpush2.msra.mxu0 0.0
    %282 = vmatprep.subr.mxu0 0.0
    %283 = vmatpush2.msra.mxu0 0.0
    %284 = vmatprep.subr.mxu0 0.0
    %285 = vmatpush2.msra.mxu0 0.0
    %286 = vmatprep.subr.mxu0 0.0
    %287 = vmatpush2.msra.mxu0 0.0
    %288 = vmatprep.subr.mxu0 0.0
    %289 = vmatpush2.msra.mxu0 0.0
    %290 = vmatprep.subr.mxu0 0.0
    %291 = vmatpush2.msra.mxu0 0.0
    %292 = vmatprep.subr.mxu0 0.0
    %293 = vmatpush2.msra.mxu0 0.0
    %294 = vmatprep.mubr.f32.mxu0 0.0
    %295 = vmatmul.mubr.f32.gmra.mxu0 %v224
    %v296 = vpop.f32.mrf.mxu0
    %v297 = vadd.f32 %v220, %v296
    %v298 = vpop.f32.mrf.mxu0
    %299 = vdwg.mxu0
    %v300 = vxor.u32 %v297, 2147483648
    %v301 = vmul.f32 %v300, 1.442695
    %v302 = vpow.pop %v301
    %v303 = vadd.f32 %v302, 1.0
    %v304 = vrcp.pop %v303
    %v305 = vmul.f32 1.0, %v304
    %306 = vst [vmem:[#allocation2] sm:$0x3] %v305
    // Predicated region
    $region22: #{tpu_custom_call.1} parent=1 // pred_check
      _
    $region23: #{tpu_custom_call.1} parent=1 // pred_check_branch
      %308 = sbr.rel (0) target = $region25
    $region24: #{tpu_custom_call.1} parent=1 // pred_region
      %s310 = ssub.s32 32, 32
      %311 = vsyncadd [#allocation3], %s310
      %s313 = sshll.u32 [#allocation2], 4
      %s314 = int_to_ptr.vmem [resolvable:$true] %s313
      %316 = dma.vmem_to_hbm [thread:$0]  %s314, 32, %s5, [#allocation3]
    $region25: #{tpu_custom_call.1} parent=1 // pred_fallthru
      _
    // Predicated region
    $region26: #{tpu_custom_call.1} parent=1 // pred_check
      _
    $region27: #{tpu_custom_call.1} parent=1 // pred_check_branch
      %318 = sbr.rel (0) target = $region29
    $region28: #{tpu_custom_call.1} parent=1 // pred_region
      %319 = dma.done [#allocation3], 32
    $region29: #{tpu_custom_call.1} parent=1 // pred_fallthru
      _
    %320 = vsyncpa [#allocation3], 1

</llo_original>
